<compile_context>
chip_gen: v7x
topology: tpu7x:2x2x1
jax: 0.10.0
libtpu: 0.0.40
codegen_flags: <defaults>
</compile_context>

<pallas_src>
import jax
import jax.numpy as jnp
from jax.experimental import pallas as pl
from jax.experimental.pallas import tpu as pltpu

LANE = 128  # TPU lane width; pad the output feature dim to a multiple of this.


def actor_policy_kernel(x_ref, w1_ref, b1_ref, g_ref, beta_ref,
                        w2_ref, b2_ref, w3_ref, b3_ref, o_ref):
    # x: [B, S] f32; w*: bf16 (pre-transposed to [in, out]); biases/gamma/beta f32.
    x = x_ref[...]

    # ---- Linear(state_size, H1): bf16 MXU inputs, f32 accumulate ----
    h1 = jnp.dot(x.astype(jnp.bfloat16), w1_ref[...],
                 preferred_element_type=jnp.float32) + b1_ref[...]      # [B, H1]

    # ---- BatchNorm1d(H1), training-mode batch stats, fused affine + ReLU ----
    mean = jnp.mean(h1, axis=0, keepdims=True)                          # [1, H1]
    var = jnp.mean((h1 - mean) * (h1 - mean), axis=0, keepdims=True)    # biased
    scale = g_ref[...] * jax.lax.rsqrt(var + 1e-5)                      # [1, H1]
    shift = beta_ref[...] - mean * scale
    h1 = jnp.maximum(h1 * scale + shift, 0.0)

    # ---- Linear(H1, H2) + ReLU ----
    h2 = jnp.dot(h1.astype(jnp.bfloat16), w2_ref[...],
                 preferred_element_type=jnp.float32) + b2_ref[...]      # [B, H2]
    h2 = jnp.maximum(h2, 0.0)

    # ---- Linear(H2, A_pad) + Tanh (A zero-padded to 128 lanes) ----
    h3 = jnp.dot(h2.astype(jnp.bfloat16), w3_ref[...],
                 preferred_element_type=jnp.float32) + b3_ref[...]      # [B, A_pad]
    o_ref[...] = jnp.tanh(h3)


def init_params(key, state_size, action_size, hidden=(256, 128)):
    """f32 master params, uniform fan-in scaled like nn.Linear defaults."""
    ks = jax.random.split(key, 6)

    def lin(kw, kb, fan_in, fan_out):
        bound = 1.0 / jnp.sqrt(fan_in)
        w = jax.random.uniform(kw, (fan_in, fan_out), jnp.float32, -bound, bound)
        b = jax.random.uniform(kb, (1, fan_out), jnp.float32, -bound, bound)
        return w, b

    w1, b1 = lin(ks[0], ks[1], state_size, hidden[0])
    w2, b2 = lin(ks[2], ks[3], hidden[0], hidden[1])
    w3, b3 = lin(ks[4], ks[5], hidden[1], action_size)
    return {
        "w1": w1, "b1": b1,
        "gamma": jnp.ones((1, hidden[0]), jnp.float32),
        "beta": jnp.zeros((1, hidden[0]), jnp.float32),
        "w2": w2, "b2": b2,
        "w3": w3, "b3": b3,
    }


def prepare_params(params):
    """One-time host-side prep: pad action dim to a lane multiple and cast
    matmul weights to bf16 (halves weight DMA; native bf16 MXU on v6e/v7x)."""
    w3 = params["w3"]
    b3 = params["b3"]
    h2, a = w3.shape
    a_pad = ((a + LANE - 1) // LANE) * LANE
    w3p = jnp.zeros((h2, a_pad), jnp.float32).at[:, :a].set(w3)
    b3p = jnp.zeros((1, a_pad), jnp.float32).at[:, :a].set(b3)
    return {
        "w1": params["w1"].astype(jnp.bfloat16),
        "b1": params["b1"],
        "gamma": params["gamma"],
        "beta": params["beta"],
        "w2": params["w2"].astype(jnp.bfloat16),
        "b2": params["b2"],
        "w3": w3p.astype(jnp.bfloat16),
        "b3": b3p,
        "action_size": a,
    }


def actor_policy_forward(x, kp):
    """x: [B, state_size] f32, B >= 2 (BatchNorm training-mode needs a batch).
    kp: output of prepare_params()."""
    B, S = x.shape
    H1 = kp["w1"].shape[1]
    H2 = kp["w2"].shape[1]
    A_pad = kp["w3"].shape[1]
    A = kp["action_size"]

    args = (x, kp["w1"], kp["b1"], kp["gamma"], kp["beta"],
            kp["w2"], kp["b2"], kp["w3"], kp["b3"])
    vmem = pl.BlockSpec(memory_space=pltpu.VMEM)

    param_bytes = sum(int(a.size) * a.dtype.itemsize for a in args[1:])
    cost = pl.CostEstimate(
        flops=2 * B * (S * H1 + H1 * H2 + H2 * A_pad),
        transcendentals=B * A_pad + H1,            # tanh + rsqrt
        bytes_accessed=int(x.size) * 4 + param_bytes + B * A_pad * 4,
    )

    out = pl.pallas_call(
        actor_policy_kernel,
        out_shape=jax.ShapeDtypeStruct((B, A_pad), jnp.float32),
        in_specs=[vmem] * len(args),
        out_specs=vmem,
        compiler_params=pltpu.CompilerParams(
            # Headroom for large rollout batches kept whole-batch resident;
            # still within v7x's 64 MiB physical VMEM.
            vmem_limit_bytes=64 * 1024 * 1024,
        ),
        cost_estimate=cost,
    )(*args)
    return out[:, :A]


def _reference(x, kp):
    """Pure-JAX reference mirroring the kernel numerics (bf16 MXU inputs,
    f32 accumulate) so the comparison checks plumbing, not precision."""
    f32 = jnp.float32
    h1 = jnp.dot(x.astype(jnp.bfloat16), kp["w1"],
                 preferred_element_type=f32) + kp["b1"]
    mean = h1.mean(axis=0, keepdims=True)
    var = ((h1 - mean) ** 2).mean(axis=0, keepdims=True)
    scale = kp["gamma"] * jax.lax.rsqrt(var + 1e-5)
    h1 = jnp.maximum(h1 * scale + (kp["beta"] - mean * scale), 0.0)
    h2 = jnp.maximum(jnp.dot(h1.astype(jnp.bfloat16), kp["w2"],
                             preferred_element_type=f32) + kp["b2"], 0.0)
    h3 = jnp.dot(h2.astype(jnp.bfloat16), kp["w3"],
                 preferred_element_type=f32) + kp["b3"]
    return jnp.tanh(h3)[:, :kp["action_size"]]


if __name__ == "__main__":
    state_size, action_size = 32, 8
    batch = 8  # BatchNorm1d (training mode) needs batch > 1; multiple of 8 sublanes.

    key = jax.random.PRNGKey(0)
    kx, kp_key = jax.random.split(key)
    x = jax.random.normal(kx, (batch, state_size), jnp.float32)
    params = init_params(kp_key, state_size, action_size)
    kparams = prepare_params(params)

    out = actor_policy_forward(x, kparams)
    out = jax.block_until_ready(out)

    ref = _reference(x, kparams)
    assert out.shape == (batch, action_size)
    assert bool(jnp.all(jnp.abs(out) <= 1.0 + 1e-6)), "tanh range violated"
    assert jnp.allclose(out, ref, atol=1e-3, rtol=1e-3), "mismatch vs JAX reference"

    print("KERNEL_OK")
</pallas_src>

<mosaic_0001>
module attributes {stable_mosaic.version = 11 : i64} {
  func.func @actor_policy_kernel(%arg0: memref<8x32xf32, #tpu.memory_space<vmem>>, %arg1: memref<32x256xbf16, #tpu.memory_space<vmem>>, %arg2: memref<1x256xf32, #tpu.memory_space<vmem>>, %arg3: memref<1x256xf32, #tpu.memory_space<vmem>>, %arg4: memref<1x256xf32, #tpu.memory_space<vmem>>, %arg5: memref<256x128xbf16, #tpu.memory_space<vmem>>, %arg6: memref<1x128xf32, #tpu.memory_space<vmem>>, %arg7: memref<128x128xbf16, #tpu.memory_space<vmem>>, %arg8: memref<1x128xf32, #tpu.memory_space<vmem>>, %arg9: memref<8x128xf32, #tpu.memory_space<vmem>>) attributes {dimension_semantics = [], scalar_prefetch = 0 : i64, scratch_operands = 0 : i64, tpu.core_type = #tpu.core_type<tc>} {
    %c0 = arith.constant 0 : index
    %c0_0 = arith.constant 0 : index
    %0 = vector.load %arg0[%c0, %c0_0] : memref<8x32xf32, #tpu.memory_space<vmem>>, vector<8x32xf32>
    %1 = arith.truncf %0 : vector<8x32xf32> to vector<8x32xbf16>
    %c0_1 = arith.constant 0 : index
    %c0_2 = arith.constant 0 : index
    %2 = vector.load %arg1[%c0_1, %c0_2] : memref<32x256xbf16, #tpu.memory_space<vmem>>, vector<32x256xbf16>
    %cst = arith.constant dense<0.000000e+00> : vector<8x256xf32>
    %3 = tpu.matmul %1, %2, %cst {dimension_numbers = #tpu.dot_dimension_numbers<[1], [0], [0], [1], [0, 0, 1, 1], [], []>} : vector<8x32xbf16>, vector<32x256xbf16>, vector<8x256xf32> -> vector<8x256xf32>
    %c0_3 = arith.constant 0 : index
    %c0_4 = arith.constant 0 : index
    %4 = vector.load %arg2[%c0_3, %c0_4] : memref<1x256xf32, #tpu.memory_space<vmem>>, vector<1x256xf32>
    %5 = vector.broadcast %4 : vector<1x256xf32> to vector<8x256xf32>
    %6 = arith.addf %3, %5 : vector<8x256xf32>
    %cst_5 = arith.constant dense<0.000000e+00> : vector<256xf32>
    %7 = vector.multi_reduction <add>, %6, %cst_5 [0] : vector<8x256xf32> to vector<256xf32>
    %8 = vector.shape_cast %7 : vector<256xf32> to vector<1x256xf32>
    %cst_6 = arith.constant 8.000000e+00 : f32
    %9 = vector.broadcast %cst_6 : f32 to vector<1x256xf32>
    %10 = arith.divf %8, %9 : vector<1x256xf32>
    %11 = vector.broadcast %10 : vector<1x256xf32> to vector<8x256xf32>
    %12 = arith.subf %6, %11 : vector<8x256xf32>
    %13 = vector.broadcast %10 : vector<1x256xf32> to vector<8x256xf32>
    %14 = arith.subf %6, %13 : vector<8x256xf32>
    %15 = arith.mulf %12, %14 : vector<8x256xf32>
    %cst_7 = arith.constant dense<0.000000e+00> : vector<256xf32>
    %16 = vector.multi_reduction <add>, %15, %cst_7 [0] : vector<8x256xf32> to vector<256xf32>
    %17 = vector.shape_cast %16 : vector<256xf32> to vector<1x256xf32>
    %cst_8 = arith.constant 8.000000e+00 : f32
    %18 = vector.broadcast %cst_8 : f32 to vector<1x256xf32>
    %19 = arith.divf %17, %18 : vector<1x256xf32>
    %c0_9 = arith.constant 0 : index
    %c0_10 = arith.constant 0 : index
    %20 = vector.load %arg3[%c0_9, %c0_10] : memref<1x256xf32, #tpu.memory_space<vmem>>, vector<1x256xf32>
    %cst_11 = arith.constant 9.99999974E-6 : f32
    %21 = vector.broadcast %cst_11 : f32 to vector<1x256xf32>
    %22 = arith.addf %19, %21 : vector<1x256xf32>
    %23 = math.rsqrt %22 : vector<1x256xf32>
    %24 = arith.mulf %20, %23 : vector<1x256xf32>
    %c0_12 = arith.constant 0 : index
    %c0_13 = arith.constant 0 : index
    %25 = vector.load %arg4[%c0_12, %c0_13] : memref<1x256xf32, #tpu.memory_space<vmem>>, vector<1x256xf32>
    %26 = arith.mulf %10, %24 : vector<1x256xf32>
    %27 = arith.subf %25, %26 : vector<1x256xf32>
    %28 = vector.broadcast %24 : vector<1x256xf32> to vector<8x256xf32>
    %29 = arith.mulf %6, %28 : vector<8x256xf32>
    %30 = vector.broadcast %27 : vector<1x256xf32> to vector<8x256xf32>
    %31 = arith.addf %29, %30 : vector<8x256xf32>
    %cst_14 = arith.constant 0.000000e+00 : f32
    %32 = vector.broadcast %cst_14 : f32 to vector<8x256xf32>
    %33 = arith.maximumf %31, %32 : vector<8x256xf32>
    %34 = arith.truncf %33 : vector<8x256xf32> to vector<8x256xbf16>
    %c0_15 = arith.constant 0 : index
    %c0_16 = arith.constant 0 : index
    %35 = vector.load %arg5[%c0_15, %c0_16] : memref<256x128xbf16, #tpu.memory_space<vmem>>, vector<256x128xbf16>
    %cst_17 = arith.constant dense<0.000000e+00> : vector<8x128xf32>
    %36 = tpu.matmul %34, %35, %cst_17 {dimension_numbers = #tpu.dot_dimension_numbers<[1], [0], [0], [1], [0, 0, 1, 1], [], []>} : vector<8x256xbf16>, vector<256x128xbf16>, vector<8x128xf32> -> vector<8x128xf32>
    %c0_18 = arith.constant 0 : index
    %c0_19 = arith.constant 0 : index
    %37 = vector.load %arg6[%c0_18, %c0_19] : memref<1x128xf32, #tpu.memory_space<vmem>>, vector<1x128xf32>
    %38 = vector.broadcast %37 : vector<1x128xf32> to vector<8x128xf32>
    %39 = arith.addf %36, %38 : vector<8x128xf32>
    %cst_20 = arith.constant 0.000000e+00 : f32
    %40 = vector.broadcast %cst_20 : f32 to vector<8x128xf32>
    %41 = arith.maximumf %39, %40 : vector<8x128xf32>
    %42 = arith.truncf %41 : vector<8x128xf32> to vector<8x128xbf16>
    %c0_21 = arith.constant 0 : index
    %c0_22 = arith.constant 0 : index
    %43 = vector.load %arg7[%c0_21, %c0_22] : memref<128x128xbf16, #tpu.memory_space<vmem>>, vector<128x128xbf16>
    %cst_23 = arith.constant dense<0.000000e+00> : vector<8x128xf32>
    %44 = tpu.matmul %42, %43, %cst_23 {dimension_numbers = #tpu.dot_dimension_numbers<[1], [0], [0], [1], [0, 0, 1, 1], [], []>} : vector<8x128xbf16>, vector<128x128xbf16>, vector<8x128xf32> -> vector<8x128xf32>
    %c0_24 = arith.constant 0 : index
    %c0_25 = arith.constant 0 : index
    %45 = vector.load %arg8[%c0_24, %c0_25] : memref<1x128xf32, #tpu.memory_space<vmem>>, vector<1x128xf32>
    %46 = vector.broadcast %45 : vector<1x128xf32> to vector<8x128xf32>
    %47 = arith.addf %44, %46 : vector<8x128xf32>
    %48 = math.tanh %47 : vector<8x128xf32>
    %c0_26 = arith.constant 0 : index
    %c0_27 = arith.constant 0 : index
    %49 = vector.load %arg9[%c0_26, %c0_27] : memref<8x128xf32, #tpu.memory_space<vmem>>, vector<8x128xf32>
    tpu.vector_store %arg9[%c0_26, %c0_27], %48 {strides = array<i32>} : memref<8x128xf32, #tpu.memory_space<vmem>>, vector<8x128xf32>,
    return
  }
}

</mosaic_0001>

<llo_original>
// kernel: tpu_custom_call.1
$region0: #{tpu_custom_call.1}
  #allocation0 [shape = 'u32[]', space=smem, size = 0x4, offset = 0x4, fixed_abs, tag = 'smem constant byte address 0x4 - core index']
  #allocation1 [shape = 'u32[144,128]{1,0:T(1,128)}', space=vmem, size = 0x12000, scoped, tag = 'internal scratch']
  %s0 = inlined_call_operand.hbm [shape: f32[8,32], index: 0, kind: input, shape index: {}]
  %s1 = inlined_call_operand.hbm [shape: bf16[32,256], index: 1, kind: input, shape index: {}]
  %s2 = inlined_call_operand.hbm [shape: f32[1,256], index: 2, kind: input, shape index: {}]
  %s3 = inlined_call_operand.hbm [shape: f32[1,256], index: 3, kind: input, shape index: {}]
  %s4 = inlined_call_operand.hbm [shape: f32[1,256], index: 4, kind: input, shape index: {}]
  %s5 = inlined_call_operand.hbm [shape: bf16[256,128], index: 5, kind: input, shape index: {}]
  %s6 = inlined_call_operand.hbm [shape: f32[1,128], index: 6, kind: input, shape index: {}]
  %s7 = inlined_call_operand.hbm [shape: bf16[128,128], index: 7, kind: input, shape index: {}]
  %s8 = inlined_call_operand.hbm [shape: f32[1,128], index: 8, kind: input, shape index: {}]
  %s9 = inlined_call_operand.hbm [shape: f32[8,128], index: 9, kind: output, shape index: {}]
  %s10 = sld [smem:[#allocation0]]
  $region82: #{tpu_custom_call.1} parent=0
    _
  %s12 = ssub.s32 1, %s10
  %s13 = scalar_select 0, %s12, %s10
  $region1: #{tpu_custom_call.1} parent=0
    #allocation2 [shape = 'u8[4096]{0}', space=vmem, size = 0x1000, scoped, tag = 'input window, operand 0, single buffered']
    #allocation3 [shape = 's32[1]{0}', space=sflag, size = 0x4, scoped, tag = 'scoped memory for tpu_custom_call.1']
    #allocation4 [shape = 's32[1]{0}', space=sflag, size = 0x4, scoped, tag = 'scoped memory for tpu_custom_call.1']
    #allocation5 [shape = 'u8[16384]{0}', space=vmem, size = 0x4000, scoped, tag = 'input window, operand 1, single buffered']
    #allocation6 [shape = 's32[1]{0}', space=sflag, size = 0x4, scoped, tag = 'scoped memory for tpu_custom_call.1']
    #allocation7 [shape = 'u8[1024]{0}', space=vmem, size = 0x400, scoped, tag = 'input window, operand 2, single buffered']
    #allocation8 [shape = 'u8[1024]{0}', space=vmem, size = 0x400, scoped, tag = 'input window, operand 3, single buffered']
    #allocation9 [shape = 's32[1]{0}', space=sflag, size = 0x4, scoped, tag = 'scoped memory for tpu_custom_call.1']
    #allocation10 [shape = 'u8[1024]{0}', space=vmem, size = 0x400, scoped, tag = 'input window, operand 4, single buffered']
    #allocation11 [shape = 'u8[65536]{0}', space=vmem, size = 0x10000, scoped, tag = 'input window, operand 5, single buffered']
    #allocation12 [shape = 's32[1]{0}', space=sflag, size = 0x4, scoped, tag = 'scoped memory for tpu_custom_call.1']
    #allocation13 [shape = 'u8[512]{0}', space=vmem, size = 0x400, scoped, tag = 'input window, operand 6, single buffered']
    #allocation14 [shape = 'u8[32768]{0}', space=vmem, size = 0x8000, scoped, tag = 'input window, operand 7, single buffered']
    #allocation15 [shape = 's32[1]{0}', space=sflag, size = 0x4, scoped, tag = 'scoped memory for tpu_custom_call.1']
    #allocation16 [shape = 'u8[512]{0}', space=vmem, size = 0x400, scoped, tag = 'input window, operand 8, single buffered']
    #allocation17 [shape = 'u8[4096]{0}', space=vmem, size = 0x1000, scoped, tag = 'output window, operand 0, single buffered']
    %14 = vsyncpa [#allocation3], 0
    %15 = vsyncpa [#allocation6], 0
    %16 = vsyncpa [#allocation9], 0
    %17 = vsyncpa [#allocation12], 0
    %18 = vsyncpa [#allocation15], 0
    %19 = vsyncpa [#allocation4], 0
    // Predicated region
    $region2: #{tpu_custom_call.1} parent=1 // pred_check
      _
    $region3: #{tpu_custom_call.1} parent=1 // pred_check_branch
      %21 = sbr.rel (0) target = $region5
    $region4: #{tpu_custom_call.1} parent=1 // pred_region
      %s23 = ssub.s32 128, 128
      %24 = vsyncadd [#allocation3], %s23
      %s26 = sshll.u32 [#allocation2], 4
      %s27 = int_to_ptr.vmem [resolvable:$true] %s26
      %29 = dma.hbm_to_vmem [thread:$0]  %s0, 128, %s27, [#allocation3]
    $region5: #{tpu_custom_call.1} parent=1 // pred_fallthru
      _
    // Predicated region
    $region6: #{tpu_custom_call.1} parent=1 // pred_check
      _
    $region7: #{tpu_custom_call.1} parent=1 // pred_check_branch
      %31 = sbr.rel (0) target = $region9
    $region8: #{tpu_custom_call.1} parent=1 // pred_region
      %s33 = ssub.s32 512, 512
      %34 = vsyncadd [#allocation6], %s33
      %s35 = sshll.u32 [#allocation5], 4
      %s36 = int_to_ptr.vmem [resolvable:$true] %s35
      %41 = dma.hbm_to_vmem [thread:$0]  %s1, 512, %s36, [#allocation6], 128, 128, 8
    $region9: #{tpu_custom_call.1} parent=1 // pred_fallthru
      _
    // Predicated region
    $region10: #{tpu_custom_call.1} parent=1 // pred_check
      _
    $region11: #{tpu_custom_call.1} parent=1 // pred_check_branch
      %43 = sbr.rel (0) target = $region13
    $region12: #{tpu_custom_call.1} parent=1 // pred_region
      %s45 = ssub.s32 32, 32
      %46 = vsyncadd [#allocation6], %s45
      %s48 = sshll.u32 [#allocation7], 4
      %s49 = int_to_ptr.vmem [resolvable:$true] %s48
      %51 = dma.hbm_to_vmem [thread:$0]  %s2, 32, %s49, [#allocation6]
    $region13: #{tpu_custom_call.1} parent=1 // pred_fallthru
      _
    // Predicated region
    $region14: #{tpu_custom_call.1} parent=1 // pred_check
      _
    $region15: #{tpu_custom_call.1} parent=1 // pred_check_branch
      %53 = sbr.rel (0) target = $region17
    $region16: #{tpu_custom_call.1} parent=1 // pred_region
      %s55 = ssub.s32 32, 32
      %56 = vsyncadd [#allocation9], %s55
      %s58 = sshll.u32 [#allocation8], 4
      %s59 = int_to_ptr.vmem [resolvable:$true] %s58
      %61 = dma.hbm_to_vmem [thread:$0]  %s3, 32, %s59, [#allocation9]
    $region17: #{tpu_custom_call.1} parent=1 // pred_fallthru
      _
    // Predicated region
    $region18: #{tpu_custom_call.1} parent=1 // pred_check
      _
    $region19: #{tpu_custom_call.1} parent=1 // pred_check_branch
      %63 = sbr.rel (0) target = $region21
    $region20: #{tpu_custom_call.1} parent=1 // pred_region
      %s65 = ssub.s32 32, 32
      %66 = vsyncadd [#allocation9], %s65
      %s68 = sshll.u32 [#allocation10], 4
      %s69 = int_to_ptr.vmem [resolvable:$true] %s68
      %71 = dma.hbm_to_vmem [thread:$0]  %s4, 32, %s69, [#allocation9]
    $region21: #{tpu_custom_call.1} parent=1 // pred_fallthru
      _
    // Predicated region
    $region22: #{tpu_custom_call.1} parent=1 // pred_check
      _
    $region23: #{tpu_custom_call.1} parent=1 // pred_check_branch
      %73 = sbr.rel (0) target = $region25
    $region24: #{tpu_custom_call.1} parent=1 // pred_region
      %s75 = ssub.s32 2048, 2048
      %76 = vsyncadd [#allocation12], %s75
      %s77 = sshll.u32 [#allocation11], 4
      %s78 = int_to_ptr.vmem [resolvable:$true] %s77
      %83 = dma.hbm_to_vmem [thread:$0]  %s5, 2048, %s78, [#allocation12], 64, 64, 4
    $region25: #{tpu_custom_call.1} parent=1 // pred_fallthru
      _
    // Predicated region
    $region26: #{tpu_custom_call.1} parent=1 // pred_check
      _
    $region27: #{tpu_custom_call.1} parent=1 // pred_check_branch
      %85 = sbr.rel (0) target = $region29
    $region28: #{tpu_custom_call.1} parent=1 // pred_region
      %s87 = ssub.s32 16, 16
      %88 = vsyncadd [#allocation12], %s87
      %s90 = sshll.u32 [#allocation13], 4
      %s91 = int_to_ptr.vmem [resolvable:$true] %s90
      %93 = dma.hbm_to_vmem [thread:$0]  %s6, 16, %s91, [#allocation12]
    $region29: #{tpu_custom_call.1} parent=1 // pred_fallthru
      _
    // Predicated region
    $region30: #{tpu_custom_call.1} parent=1 // pred_check
      _
    $region31: #{tpu_custom_call.1} parent=1 // pred_check_branch
      %95 = sbr.rel (0) target = $region33
    $region32: #{tpu_custom_call.1} parent=1 // pred_region
      %s97 = ssub.s32 1024, 1024
      %98 = vsyncadd [#allocation15], %s97
      %s99 = sshll.u32 [#allocation14], 4
      %s100 = int_to_ptr.vmem [resolvable:$true] %s99
      %105 = dma.hbm_to_vmem [thread:$0]  %s7, 1024, %s100, [#allocation15], 64, 64, 4
    $region33: #{tpu_custom_call.1} parent=1 // pred_fallthru
      _
    // Predicated region
    $region34: #{tpu_custom_call.1} parent=1 // pred_check
      _
    $region35: #{tpu_custom_call.1} parent=1 // pred_check_branch
      %107 = sbr.rel (0) target = $region37
    $region36: #{tpu_custom_call.1} parent=1 // pred_region
      %s109 = ssub.s32 16, 16
      %110 = vsyncadd [#allocation15], %s109
      %s112 = sshll.u32 [#allocation16], 4
      %s113 = int_to_ptr.vmem [resolvable:$true] %s112
      %115 = dma.hbm_to_vmem [thread:$0]  %s8, 16, %s113, [#allocation15]
    $region37: #{tpu_custom_call.1} parent=1 // pred_fallthru
      _
    // Predicated region
    $region38: #{tpu_custom_call.1} parent=1 // pred_check
      _
    $region39: #{tpu_custom_call.1} parent=1 // pred_check_branch
      %117 = sbr.rel (0) target = $region41
    $region40: #{tpu_custom_call.1} parent=1 // pred_region
      %118 = dma.done [#allocation3], 128
    $region41: #{tpu_custom_call.1} parent=1 // pred_fallthru
      _
    // Predicated region
    $region42: #{tpu_custom_call.1} parent=1 // pred_check
      _
    $region43: #{tpu_custom_call.1} parent=1 // pred_check_branch
      %120 = sbr.rel (0) target = $region45
    $region44: #{tpu_custom_call.1} parent=1 // pred_region
      %121 = dma.done [#allocation6], 512
    $region45: #{tpu_custom_call.1} parent=1 // pred_fallthru
      _
    // Predicated region
    $region46: #{tpu_custom_call.1} parent=1 // pred_check
      _
    $region47: #{tpu_custom_call.1} parent=1 // pred_check_branch
      %123 = sbr.rel (0) target = $region49
    $region48: #{tpu_custom_call.1} parent=1 // pred_region
      %124 = dma.done [#allocation6], 32
    $region49: #{tpu_custom_call.1} parent=1 // pred_fallthru
      _
    // Predicated region
    $region50: #{tpu_custom_call.1} parent=1 // pred_check
      _
    $region51: #{tpu_custom_call.1} parent=1 // pred_check_branch
      %126 = sbr.rel (0) target = $region53
    $region52: #{tpu_custom_call.1} parent=1 // pred_region
      %127 = dma.done [#allocation9], 32
    $region53: #{tpu_custom_call.1} parent=1 // pred_fallthru
      _
    // Predicated region
    $region54: #{tpu_custom_call.1} parent=1 // pred_check
      _
    $region55: #{tpu_custom_call.1} parent=1 // pred_check_branch
      %129 = sbr.rel (0) target = $region57
    $region56: #{tpu_custom_call.1} parent=1 // pred_region
      %130 = dma.done [#allocation9], 32
    $region57: #{tpu_custom_call.1} parent=1 // pred_fallthru
      _
    // Predicated region
    $region58: #{tpu_custom_call.1} parent=1 // pred_check
      _
    $region59: #{tpu_custom_call.1} parent=1 // pred_check_branch
      %132 = sbr.rel (0) target = $region61
    $region60: #{tpu_custom_call.1} parent=1 // pred_region
      %133 = dma.done [#allocation12], 2048
    $region61: #{tpu_custom_call.1} parent=1 // pred_fallthru
      _
    // Predicated region
    $region62: #{tpu_custom_call.1} parent=1 // pred_check
      _
    $region63: #{tpu_custom_call.1} parent=1 // pred_check_branch
      %135 = sbr.rel (0) target = $region65
    $region64: #{tpu_custom_call.1} parent=1 // pred_region
      %136 = dma.done [#allocation12], 16
    $region65: #{tpu_custom_call.1} parent=1 // pred_fallthru
      _
    // Predicated region
    $region66: #{tpu_custom_call.1} parent=1 // pred_check
      _
    $region67: #{tpu_custom_call.1} parent=1 // pred_check_branch
      %138 = sbr.rel (0) target = $region69
    $region68: #{tpu_custom_call.1} parent=1 // pred_region
      %139 = dma.done [#allocation15], 1024
    $region69: #{tpu_custom_call.1} parent=1 // pred_fallthru
      _
    // Predicated region
    $region70: #{tpu_custom_call.1} parent=1 // pred_check
      _
    $region71: #{tpu_custom_call.1} parent=1 // pred_check_branch
      %141 = sbr.rel (0) target = $region73
    $region72: #{tpu_custom_call.1} parent=1 // pred_region
      %142 = dma.done [#allocation15], 16
    $region73: #{tpu_custom_call.1} parent=1 // pred_fallthru
      _
    %v144 = vld [vmem:[#allocation2] sm:$0xff]
    %v145 = vpack.c.bf16 %v144, %v144
    %v146 = vld [vmem:[#allocation5] sm:$0xff]
    %v147 = vld [vmem:[#allocation5 + $0x8] sm:$0xff]
    %v148 = vld [vmem:[#allocation5 + $0x10] sm:$0xff]
    %v149 = vld [vmem:[#allocation5 + $0x18] sm:$0xff]
    %v150 = vld [vmem:[#allocation7] sm:$0x3]
    %v152 = vlaneseq
    %v153 = vshrl.u32 %v152, 7
    %v154 = vsub.s32 0, %v153
    %v155 = vrot.slane %v150, %v154
    %v156 = vlaneseq
    %v157 = vshrl.u32 %v156, 7
    %v158 = vsub.s32 1, %v157
    %v159 = vrot.slane %v150, %v158
    %v166 = vunpack.c.l.b16 %v146
    %v167 = vunpack.c.h.b16 %v146
    %v168 = vunpack.c.l.b16 %v147
    %v169 = vunpack.c.h.b16 %v147
    %v170 = vunpack.c.l.b16 %v148
    %v171 = vunpack.c.h.b16 %v148
    %v172 = vunpack.c.l.b16 %v149
    %v173 = vunpack.c.h.b16 %v149
    %v174 = vpack.c.b16 %v168, %v166
    %v175 = vpack.c.b16 %v169, %v167
    %v176 = vpack.c.b16 %v172, %v170
    %v177 = vpack.c.b16 %v173, %v171
    %vm182 = vcmask 261120
    %v184 = vsel %vm182, %v145, 0
    %186 = vmatprep.subr.bf16.mxu0 %v175
    %187 = vmatpush1.bf16.msra.mxu0 %v174
    %188 = vmatprep.subr.bf16.mxu0 %v177
    %189 = vmatpush1.bf16.msra.mxu0 %v176
    %190 = vmatprep.subr.bf16.mxu0 0
    %191 = vmatpush1.bf16.msra.mxu0 0
    %192 = vmatprep.subr.bf16.mxu0 0
    %193 = vmatpush1.bf16.msra.mxu0 0
    %194 = vmatprep.subr.bf16.mxu0 0
    %195 = vmatpush1.bf16.msra.mxu0 0
    %196 = vmatprep.subr.bf16.mxu0 0
    %197 = vmatpush1.bf16.msra.mxu0 0
    %198 = vmatprep.subr.bf16.mxu0 0
    %199 = vmatpush1.bf16.msra.mxu0 0
    %200 = vmatprep.subr.bf16.mxu0 0
    %201 = vmatpush1.bf16.msra.mxu0 0
    %202 = vmatprep.subr.bf16.mxu0 0
    %203 = vmatpush1.bf16.msra.mxu0 0
    %204 = vmatprep.subr.bf16.mxu0 0
    %205 = vmatpush1.bf16.msra.mxu0 0
    %206 = vmatprep.subr.bf16.mxu0 0
    %207 = vmatpush1.bf16.msra.mxu0 0
    %208 = vmatprep.subr.bf16.mxu0 0
    %209 = vmatpush1.bf16.msra.mxu0 0
    %210 = vmatprep.subr.bf16.mxu0 0
    %211 = vmatpush1.bf16.msra.mxu0 0
    %212 = vmatprep.subr.bf16.mxu0 0
    %213 = vmatpush1.bf16.msra.mxu0 0
    %214 = vmatprep.subr.bf16.mxu0 0
    %215 = vmatpush1.bf16.msra.mxu0 0
    %216 = vmatprep.subr.bf16.mxu0 0
    %217 = vmatpush1.bf16.msra.mxu0 0
    %218 = vmatprep.mubr.bf16.mxu0 0
    %219 = vmatmul.mubr.bf16.gmra.mrb[0].mxu0 %v184
    %v220 = vpop.f32.mrb[0].mxu0
    %v221 = vadd.f32 %v155, %v220
    %v222 = vpop.f32.mrb[0].mxu0
    %v223 = vadd.f32 %v159, %v222
    %v224 = vpop.f32.mrb[0].mxu0
    %v225 = vpop.f32.mrb[0].mxu0
    %226 = vdwg.mxu0
    %v227 = vrot.slane %v221, 4
    %v228 = vadd.f32 %v221, %v227
    %v229 = vrot.slane %v228, 2
    %v230 = vadd.f32 %v228, %v229
    %v231 = vrot.slane %v230, 1
    %v232 = vadd.f32 %v230, %v231
    %v233 = vrot.slane %v223, 4
    %v234 = vadd.f32 %v223, %v233
    %v235 = vrot.slane %v234, 2
    %v236 = vadd.f32 %v234, %v235
    %v237 = vrot.slane %v236, 1
    %v238 = vadd.f32 %v236, %v237
    %v239 = vrcp.pop 8.0
    %v240 = vmul.f32 %v232, %v239
    %v241 = vmul.f32 %v238, %v239
    %v242 = vsub.f32 %v221, %v240
    %v243 = vsub.f32 %v223, %v241
    %v244 = vmul.f32 %v242, %v242
    %v245 = vmul.f32 %v243, %v243
    %v246 = vrot.slane %v244, 4
    %v247 = vadd.f32 %v244, %v246
    %v248 = vrot.slane %v247, 2
    %v249 = vadd.f32 %v247, %v248
    %v250 = vrot.slane %v249, 1
    %v251 = vadd.f32 %v249, %v250
    %v252 = vrot.slane %v245, 4
    %v253 = vadd.f32 %v245, %v252
    %v254 = vrot.slane %v253, 2
    %v255 = vadd.f32 %v253, %v254
    %v256 = vrot.slane %v255, 1
    %v257 = vadd.f32 %v255, %v256
    %v258 = vmul.f32 %v251, %v239
    %v259 = vmul.f32 %v257, %v239
    %v260 = vld [vmem:[#allocation8] sm:$0x3]
    %v261 = vadd.f32 %v258, 1e-05
    %v262 = vadd.f32 %v259, 1e-05
    %v263 = vrsqrt.pop %v261
    %v264 = vrsqrt.pop %v262
    %v267 = vcombine.low %v263, %v264
    %v269 = vunpack.c.l.s4 1966171168
    %v270 = vunpack.c.0.s8 %v269
    %v271 = vlaneseq
    %v272 = vshrl.u32 %v271, 7
    %v273 = vsub.s32 %v270, %v272
    %v274 = vrot.slane %v267, %v273
    %v276 = vunpack.c.l.s4 1966171168
    %v277 = vunpack.c.0.s8 %v276
    %v278 = vlaneseq
    %v279 = vshrl.u32 %v278, 7
    %v280 = vsub.s32 %v277, %v279
    %v281 = vrot.slane %v274, %v280
    %v283 = vmul.f32 %v260, %v281
    %v284 = vld [vmem:[#allocation10] sm:$0x3]
    %v286 = vlaneseq
    %v287 = vshrl.u32 %v286, 7
    %v288 = vsub.s32 0, %v287
    %v289 = vrot.slane %v283, %v288
    %v290 = vlaneseq
    %v291 = vshrl.u32 %v290, 7
    %v292 = vsub.s32 1, %v291
    %v293 = vrot.slane %v283, %v292
    %v296 = vmul.f32 %v240, %v289
    %v297 = vmul.f32 %v241, %v293
    %v300 = vcombine.low %v296, %v297
    %v302 = vunpack.c.l.s4 1966171168
    %v303 = vunpack.c.0.s8 %v302
    %v304 = vlaneseq
    %v305 = vshrl.u32 %v304, 7
    %v306 = vsub.s32 %v303, %v305
    %v307 = vrot.slane %v300, %v306
    %v309 = vunpack.c.l.s4 1966171168
    %v310 = vunpack.c.0.s8 %v309
    %v311 = vlaneseq
    %v312 = vshrl.u32 %v311, 7
    %v313 = vsub.s32 %v310, %v312
    %v314 = vrot.slane %v307, %v313
    %v316 = vsub.f32 %v284, %v314
    %v317 = vmul.f32 %v221, %v289
    %v318 = vmul.f32 %v223, %v293
    %v320 = vlaneseq
    %v321 = vshrl.u32 %v320, 7
    %v322 = vsub.s32 0, %v321
    %v323 = vrot.slane %v316, %v322
    %v324 = vlaneseq
    %v325 = vshrl.u32 %v324, 7
    %v326 = vsub.s32 1, %v325
    %v327 = vrot.slane %v316, %v326
    %v330 = vadd.f32 %v317, %v323
    %v331 = vadd.f32 %v318, %v327
    %v332 = vmax.f32 %v330, 0.0
    %v333 = vmax.f32 %v331, 0.0
    %v334 = vpack.c.bf16 %v332, %v332
    %v335 = vpack.c.bf16 %v333, %v333
    %v336 = vld [vmem:[#allocation11] sm:$0xf]
    %v337 = vld [vmem:[#allocation11 + $0x4] sm:$0xf]
    %v338 = vld [vmem:[#allocation11 + $0x8] sm:$0xf]
    %v339 = vld [vmem:[#allocation11 + $0xc] sm:$0xf]
    %v340 = vld [vmem:[#allocation11 + $0x10] sm:$0xf]
    %v341 = vld [vmem:[#allocation11 + $0x14] sm:$0xf]
    %v342 = vld [vmem:[#allocation11 + $0x18] sm:$0xf]
    %v343 = vld [vmem:[#allocation11 + $0x1c] sm:$0xf]
    %v344 = vld [vmem:[#allocation11 + $0x20] sm:$0xf]
    %v345 = vld [vmem:[#allocation11 + $0x24] sm:$0xf]
    %v346 = vld [vmem:[#allocation11 + $0x28] sm:$0xf]
    %v347 = vld [vmem:[#allocation11 + $0x2c] sm:$0xf]
    %v348 = vld [vmem:[#allocation11 + $0x30] sm:$0xf]
    %v349 = vld [vmem:[#allocation11 + $0x34] sm:$0xf]
    %v350 = vld [vmem:[#allocation11 + $0x38] sm:$0xf]
    %v351 = vld [vmem:[#allocation11 + $0x3c] sm:$0xf]
    %v352 = vld [vmem:[#allocation11 + $0x40] sm:$0xf]
    %v353 = vld [vmem:[#allocation11 + $0x44] sm:$0xf]
    %v354 = vld [vmem:[#allocation11 + $0x48] sm:$0xf]
    %v355 = vld [vmem:[#allocation11 + $0x4c] sm:$0xf]
    %v356 = vld [vmem:[#allocation11 + $0x50] sm:$0xf]
    %v357 = vld [vmem:[#allocation11 + $0x54] sm:$0xf]
    %v358 = vld [vmem:[#allocation11 + $0x58] sm:$0xf]
    %v359 = vld [vmem:[#allocation11 + $0x5c] sm:$0xf]
    %v360 = vld [vmem:[#allocation11 + $0x60] sm:$0xf]
    %v361 = vld [vmem:[#allocation11 + $0x64] sm:$0xf]
    %v362 = vld [vmem:[#allocation11 + $0x68] sm:$0xf]
    %v363 = vld [vmem:[#allocation11 + $0x6c] sm:$0xf]
    %v364 = vld [vmem:[#allocation11 + $0x70] sm:$0xf]
    %v365 = vld [vmem:[#allocation11 + $0x74] sm:$0xf]
    %v366 = vld [vmem:[#allocation11 + $0x78] sm:$0xf]
    %v367 = vld [vmem:[#allocation11 + $0x7c] sm:$0xf]
    %v368 = vld [vmem:[#allocation13] sm:$0x1]
    %v370 = vlaneseq
    %v371 = vshrl.u32 %v370, 7
    %v372 = vsub.s32 0, %v371
    %v373 = vrot.slane %v368, %v372
    %v407 = vunpack.c.l.b16 %v336
    %v408 = vunpack.c.l.b16 %v337
    %v409 = vunpack.c.l.b16 %v338
    %v410 = vunpack.c.l.b16 %v339
    %v411 = vunpack.c.l.b16 %v340
    %v412 = vunpack.c.l.b16 %v341
    %v413 = vunpack.c.l.b16 %v342
    %v414 = vunpack.c.l.b16 %v343
    %v415 = vunpack.c.l.b16 %v344
    %v416 = vunpack.c.l.b16 %v345
    %v417 = vunpack.c.l.b16 %v346
    %v418 = vunpack.c.l.b16 %v347
    %v419 = vunpack.c.l.b16 %v348
    %v420 = vunpack.c.l.b16 %v349
    %v421 = vunpack.c.l.b16 %v350
    %v422 = vunpack.c.l.b16 %v351
    %v423 = vunpack.c.l.b16 %v352
    %v424 = vunpack.c.l.b16 %v353
    %v425 = vunpack.c.l.b16 %v354
    %v426 = vunpack.c.l.b16 %v355
    %v427 = vunpack.c.l.b16 %v356
    %v428 = vunpack.c.l.b16 %v357
    %v429 = vunpack.c.l.b16 %v358
    %v430 = vunpack.c.l.b16 %v359
    %v431 = vunpack.c.l.b16 %v360
    %v432 = vunpack.c.l.b16 %v361
    %v433 = vunpack.c.l.b16 %v362
    %v434 = vunpack.c.l.b16 %v363
    %v435 = vunpack.c.l.b16 %v364
    %v436 = vunpack.c.l.b16 %v365
    %v437 = vunpack.c.l.b16 %v366
    %v438 = vunpack.c.l.b16 %v367
    %v439 = vpack.c.b16 %v408, %v407
    %v440 = vpack.c.b16 %v410, %v409
    %v441 = vpack.c.b16 %v412, %v411
    %v442 = vpack.c.b16 %v414, %v413
    %v443 = vpack.c.b16 %v416, %v415
    %v444 = vpack.c.b16 %v418, %v417
    %v445 = vpack.c.b16 %v420, %v419
    %v446 = vpack.c.b16 %v422, %v421
    %v447 = vpack.c.b16 %v424, %v423
    %v448 = vpack.c.b16 %v426, %v425
    %v449 = vpack.c.b16 %v428, %v427
    %v450 = vpack.c.b16 %v430, %v429
    %v451 = vpack.c.b16 %v432, %v431
    %v452 = vpack.c.b16 %v434, %v433
    %v453 = vpack.c.b16 %v436, %v435
    %v454 = vpack.c.b16 %v438, %v437
    %471 = vmatprep.subr.bf16.mxu0 0
    %472 = vmatpush1.bf16.msra.mxu0 %v439
    %473 = vmatprep.subr.bf16.mxu0 0
    %474 = vmatpush1.bf16.msra.mxu0 %v440
    %475 = vmatprep.subr.bf16.mxu0 0
    %476 = vmatpush1.bf16.msra.mxu0 %v441
    %477 = vmatprep.subr.bf16.mxu0 0
    %478 = vmatpush1.bf16.msra.mxu0 %v442
    %479 = vmatprep.subr.bf16.mxu0 0
    %480 = vmatpush1.bf16.msra.mxu0 %v443
    %481 = vmatprep.subr.bf16.mxu0 0
    %482 = vmatpush1.bf16.msra.mxu0 %v444
    %483 = vmatprep.subr.bf16.mxu0 0
    %484 = vmatpush1.bf16.msra.mxu0 %v445
    %485 = vmatprep.subr.bf16.mxu0 0
    %486 = vmatpush1.bf16.msra.mxu0 %v446
    %487 = vmatprep.subr.bf16.mxu0 0
    %488 = vmatpush1.bf16.msra.mxu0 %v447
    %489 = vmatprep.subr.bf16.mxu0 0
    %490 = vmatpush1.bf16.msra.mxu0 %v448
    %491 = vmatprep.subr.bf16.mxu0 0
    %492 = vmatpush1.bf16.msra.mxu0 %v449
    %493 = vmatprep.subr.bf16.mxu0 0
    %494 = vmatpush1.bf16.msra.mxu0 %v450
    %495 = vmatprep.subr.bf16.mxu0 0
    %496 = vmatpush1.bf16.msra.mxu0 %v451
    %497 = vmatprep.subr.bf16.mxu0 0
    %498 = vmatpush1.bf16.msra.mxu0 %v452
    %499 = vmatprep.subr.bf16.mxu0 0
    %500 = vmatpush1.bf16.msra.mxu0 %v453
    %501 = vmatprep.subr.bf16.mxu0 0
    %502 = vmatpush1.bf16.msra.mxu0 %v454
    %503 = vmatprep.mubr.bf16.mxu0 %v335
    %504 = vmatmul.mubr.bf16.gmra.mrb[0].mxu0 %v334
    %v505 = vpop.f32.mrb[0].mxu0
    %v506 = vadd.f32 %v373, %v505
    %v507 = vpop.f32.mrb[0].mxu0
    %v508 = vpop.f32.mrb[0].mxu0
    %v509 = vpop.f32.mrb[0].mxu0
    %510 = vdwg.mxu0
    %v511 = vmax.f32 %v506, 0.0
    %v512 = vpack.c.bf16 %v511, %v511
    %v513 = vld [vmem:[#allocation14] sm:$0xf]
    %v514 = vld [vmem:[#allocation14 + $0x4] sm:$0xf]
    %v515 = vld [vmem:[#allocation14 + $0x8] sm:$0xf]
    %v516 = vld [vmem:[#allocation14 + $0xc] sm:$0xf]
    %v517 = vld [vmem:[#allocation14 + $0x10] sm:$0xf]
    %v518 = vld [vmem:[#allocation14 + $0x14] sm:$0xf]
    %v519 = vld [vmem:[#allocation14 + $0x18] sm:$0xf]
    %v520 = vld [vmem:[#allocation14 + $0x1c] sm:$0xf]
    %v521 = vld [vmem:[#allocation14 + $0x20] sm:$0xf]
    %v522 = vld [vmem:[#allocation14 + $0x24] sm:$0xf]
    %v523 = vld [vmem:[#allocation14 + $0x28] sm:$0xf]
    %v524 = vld [vmem:[#allocation14 + $0x2c] sm:$0xf]
    %v525 = vld [vmem:[#allocation14 + $0x30] sm:$0xf]
    %v526 = vld [vmem:[#allocation14 + $0x34] sm:$0xf]
    %v527 = vld [vmem:[#allocation14 + $0x38] sm:$0xf]
    %v528 = vld [vmem:[#allocation14 + $0x3c] sm:$0xf]
    %v529 = vld [vmem:[#allocation16] sm:$0x1]
    %v531 = vlaneseq
    %v532 = vshrl.u32 %v531, 7
    %v533 = vsub.s32 0, %v532
    %v534 = vrot.slane %v529, %v533
    %v552 = vunpack.c.l.b16 %v513
    %v553 = vunpack.c.l.b16 %v514
    %v554 = vunpack.c.l.b16 %v515
    %v555 = vunpack.c.l.b16 %v516
    %v556 = vunpack.c.l.b16 %v517
    %v557 = vunpack.c.l.b16 %v518
    %v558 = vunpack.c.l.b16 %v519
    %v559 = vunpack.c.l.b16 %v520
    %v560 = vunpack.c.l.b16 %v521
    %v561 = vunpack.c.l.b16 %v522
    %v562 = vunpack.c.l.b16 %v523
    %v563 = vunpack.c.l.b16 %v524
    %v564 = vunpack.c.l.b16 %v525
    %v565 = vunpack.c.l.b16 %v526
    %v566 = vunpack.c.l.b16 %v527
    %v567 = vunpack.c.l.b16 %v528
    %v568 = vpack.c.b16 %v553, %v552
    %v569 = vpack.c.b16 %v555, %v554
    %v570 = vpack.c.b16 %v557, %v556
    %v571 = vpack.c.b16 %v559, %v558
    %v572 = vpack.c.b16 %v561, %v560
    %v573 = vpack.c.b16 %v563, %v562
    %v574 = vpack.c.b16 %v565, %v564
    %v575 = vpack.c.b16 %v567, %v566
    %584 = vmatprep.subr.bf16.mxu0 0
    %585 = vmatpush1.bf16.msra.mxu0 %v568
    %586 = vmatprep.subr.bf16.mxu0 0
    %587 = vmatpush1.bf16.msra.mxu0 %v569
    %588 = vmatprep.subr.bf16.mxu0 0
    %589 = vmatpush1.bf16.msra.mxu0 %v570
    %590 = vmatprep.subr.bf16.mxu0 0
    %591 = vmatpush1.bf16.msra.mxu0 %v571
    %592 = vmatprep.subr.bf16.mxu0 0
    %593 = vmatpush1.bf16.msra.mxu0 %v572
    %594 = vmatprep.subr.bf16.mxu0 0
    %595 = vmatpush1.bf16.msra.mxu0 %v573
    %596 = vmatprep.subr.bf16.mxu0 0
    %597 = vmatpush1.bf16.msra.mxu0 %v574
    %598 = vmatprep.subr.bf16.mxu0 0
    %599 = vmatpush1.bf16.msra.mxu0 %v575
    %600 = vmatprep.subr.bf16.mxu0 0
    %601 = vmatpush1.bf16.msra.mxu0 0
    %602 = vmatprep.subr.bf16.mxu0 0
    %603 = vmatpush1.bf16.msra.mxu0 0
    %604 = vmatprep.subr.bf16.mxu0 0
    %605 = vmatpush1.bf16.msra.mxu0 0
    %606 = vmatprep.subr.bf16.mxu0 0
    %607 = vmatpush1.bf16.msra.mxu0 0
    %608 = vmatprep.subr.bf16.mxu0 0
    %609 = vmatpush1.bf16.msra.mxu0 0
    %610 = vmatprep.subr.bf16.mxu0 0
    %611 = vmatpush1.bf16.msra.mxu0 0
    %612 = vmatprep.subr.bf16.mxu0 0
    %613 = vmatpush1.bf16.msra.mxu0 0
    %614 = vmatprep.subr.bf16.mxu0 0
    %615 = vmatpush1.bf16.msra.mxu0 0
    %616 = vmatprep.mubr.bf16.mxu0 0
    %617 = vmatmul.mubr.bf16.gmra.mrb[0].mxu0 %v512
    %v618 = vpop.f32.mrb[0].mxu0
    %v619 = vadd.f32 %v534, %v618
    %v620 = vpop.f32.mrb[0].mxu0
    %v621 = vpop.f32.mrb[0].mxu0
    %v622 = vpop.f32.mrb[0].mxu0
    %623 = vdwg.mxu0
    %v624 = vtanh.pop %v619
    %625 = vst [vmem:[#allocation17] sm:$0xff] %v624
    // Predicated region
    $region74: #{tpu_custom_call.1} parent=1 // pred_check
      _
    $region75: #{tpu_custom_call.1} parent=1 // pred_check_branch
      %627 = sbr.rel (0) target = $region77
    $region76: #{tpu_custom_call.1} parent=1 // pred_region
      %s629 = ssub.s32 128, 128
      %630 = vsyncadd [#allocation4], %s629
      %s632 = sshll.u32 [#allocation17], 4
      %s633 = int_to_ptr.vmem [resolvable:$true] %s632
      %635 = dma.vmem_to_hbm [thread:$0]  %s633, 128, %s9, [#allocation4]
    $region77: #{tpu_custom_call.1} parent=1 // pred_fallthru
      _
    // Predicated region
    $region78: #{tpu_custom_call.1} parent=1 // pred_check
      _
    $region79: #{tpu_custom_call.1} parent=1 // pred_check_branch
      %637 = sbr.rel (0) target = $region81
    $region80: #{tpu_custom_call.1} parent=1 // pred_region
      %638 = dma.done [#allocation4], 128
    $region81: #{tpu_custom_call.1} parent=1 // pred_fallthru
      _
    %639 = vsyncpa [#allocation3], 1
    %640 = vsyncpa [#allocation6], 1
    %641 = vsyncpa [#allocation9], 1
    %642 = vsyncpa [#allocation12], 1
    %643 = vsyncpa [#allocation15], 1
    %644 = vsyncpa [#allocation4], 1

</llo_original>
